<compile_context>
chip_gen: v7x
topology: tpu7x:2x2x1
jax: 0.10.0
libtpu: 0.0.40
codegen_flags: <defaults>
</compile_context>

<pallas_src>
import functools

import jax
import jax.numpy as jnp
from jax import lax
from jax.experimental import pallas as pl
from jax.experimental.pallas import tpu as pltpu


def _round_up(x: int, m: int) -> int:
    return (x + m - 1) // m * m


def ff_kernel_fused(x_ref, w_ref, b_ref, o_ref):
    # Single K step: contract, add bias, ReLU, store.  No scratch needed.
    # x_ref: (tm, K)   w_ref: (tn, K)   b_ref: (1, tn)   o_ref: (tm, tn)
    acc = lax.dot_general(
        x_ref[...],
        w_ref[...],
        dimension_numbers=(((1,), (1,)), ((), ())),
        preferred_element_type=jnp.float32,
    )
    o_ref[...] = jnp.maximum(acc + b_ref[...], 0.0).astype(o_ref.dtype)


def ff_kernel_ktiled(x_ref, w_ref, b_ref, o_ref, acc_ref):
    # General K-tiled path with an f32 VMEM accumulator resident across K.
    # x_ref: (tm, tk)  w_ref: (tn, tk)  b_ref: (1, tn)  o_ref/acc_ref: (tm, tn)
    k = pl.program_id(2)

    @pl.when(k == 0)
    def _():
        acc_ref[...] = jnp.zeros_like(acc_ref)

    acc_ref[...] += lax.dot_general(
        x_ref[...],
        w_ref[...],
        dimension_numbers=(((1,), (1,)), ((), ())),
        preferred_element_type=jnp.float32,
    )

    @pl.when(k == pl.num_programs(2) - 1)
    def _():
        y = acc_ref[...] + b_ref[...]          # bias only at finalize
        o_ref[...] = jnp.maximum(y, 0.0).astype(o_ref.dtype)


@functools.partial(jax.jit, static_argnames=("tm", "tn", "tk"))
def ff_layer(x, weight, bias, *, tm=None, tn=None, tk=None):
    """y = relu(x @ weight.T + bias).

    x: (B, D_in) f32; weight: (D_out, D_in) f32 (PyTorch nn.Linear layout);
    bias: (D_out,) f32.
    """
    B, D_in = x.shape
    D_out = weight.shape[0]

    # Tile sizes: sublane-aligned M, lane-dense (>=128) N and K.  Caps keep
    # double-buffered tiles small relative to every generation's VMEM budget
    # (~2*(tm*tk + tn*tk)*4B + out + acc  <  ~3 MiB at the caps below).
    if tm is None:
        tm = min(256, _round_up(B, 8))
    if tn is None:
        tn = min(256, _round_up(D_out, 128))
    if tk is None:
        tk = min(512, _round_up(D_in, 128))

    Bp = _round_up(B, tm)
    Np = _round_up(D_out, tn)
    Kp = _round_up(D_in, tk)

    # Zero-pad to tile multiples.  Padded K columns are zero in both x and W,
    # so they contribute nothing; padded N columns / M rows are sliced off.
    x_p = x if (Bp == B and Kp == D_in) else jnp.pad(
        x, ((0, Bp - B), (0, Kp - D_in)))
    w_p = weight if (Np == D_out and Kp == D_in) else jnp.pad(
        weight, ((0, Np - D_out), (0, Kp - D_in)))
    b_p = (bias if Np == D_out else jnp.pad(bias, (0, Np - D_out)))
    b_p = b_p.reshape(1, Np)

    grid_m, grid_n, grid_k = Bp // tm, Np // tn, Kp // tk

    flops = 2 * Bp * Kp * Np
    bytes_accessed = 4 * (Bp * Kp * grid_n + Np * Kp * grid_m + Bp * Np + Np)
    cost = pl.CostEstimate(
        flops=flops, bytes_accessed=bytes_accessed, transcendentals=0)

    if grid_k == 1:
        # Fused single-pass: whole K fits in one tile.  No accumulator
        # scratch, no K axis in the grid -> all axes parallel.
        out_p = pl.pallas_call(
            ff_kernel_fused,
            out_shape=jax.ShapeDtypeStruct((Bp, Np), x.dtype),
            grid_spec=pltpu.PrefetchScalarGridSpec(
                num_scalar_prefetch=0,
                grid=(grid_m, grid_n),
                in_specs=[
                    pl.BlockSpec((tm, Kp), lambda i, j: (i, 0)),   # x
                    pl.BlockSpec((tn, Kp), lambda i, j: (j, 0)),   # weight
                    pl.BlockSpec((1, tn), lambda i, j: (0, j)),    # bias
                ],
                out_specs=pl.BlockSpec((tm, tn), lambda i, j: (i, j)),
            ),
            compiler_params=pltpu.CompilerParams(
                dimension_semantics=("parallel", "parallel"),
                vmem_limit_bytes=32 << 20,
            ),
            cost_estimate=cost,
        )(x_p, w_p, b_p)
    else:
        out_p = pl.pallas_call(
            ff_kernel_ktiled,
            out_shape=jax.ShapeDtypeStruct((Bp, Np), x.dtype),
            grid_spec=pltpu.PrefetchScalarGridSpec(
                num_scalar_prefetch=0,
                grid=(grid_m, grid_n, grid_k),
                in_specs=[
                    pl.BlockSpec((tm, tk), lambda i, j, k: (i, k)),   # x
                    pl.BlockSpec((tn, tk), lambda i, j, k: (j, k)),   # weight
                    pl.BlockSpec((1, tn), lambda i, j, k: (0, j)),    # bias
                ],
                out_specs=pl.BlockSpec((tm, tn), lambda i, j, k: (i, j)),
                scratch_shapes=[pltpu.VMEM((tm, tn), jnp.float32)],
            ),
            compiler_params=pltpu.CompilerParams(
                dimension_semantics=("parallel", "parallel", "arbitrary"),
                vmem_limit_bytes=32 << 20,
            ),
            cost_estimate=cost,
        )(x_p, w_p, b_p)

    if Bp != B or Np != D_out:
        out_p = out_p[:B, :D_out]
    return out_p


def ff_layer_ref(x, weight, bias):
    return jnp.maximum(x @ weight.T + bias, 0.0)


if __name__ == "__main__":
    key = jax.random.PRNGKey(0)
    kx, kw, kb = jax.random.split(key, 3)

    batch, input_dim, output_dim = 8, 32, 64

    x = jax.random.normal(kx, (batch, input_dim), dtype=jnp.float32)
    # Deterministic synthetic parameters (PyTorch nn.Linear shapes).
    weight = jax.random.normal(kw, (output_dim, input_dim),
                               dtype=jnp.float32) * 0.1
    bias = jax.random.normal(kb, (output_dim,), dtype=jnp.float32) * 0.1

    out = ff_layer(x, weight, bias)
    out = jax.block_until_ready(out)

    ref = ff_layer_ref(x, weight, bias)
    assert out.shape == (batch, output_dim)
    assert jnp.allclose(out, ref, atol=1e-5, rtol=1e-5)

    # Also exercise the K-tiled path with a larger contraction dim.
    k2 = jax.random.PRNGKey(1)
    ka, kwb, kbb = jax.random.split(k2, 3)
    B2, Din2, Dout2 = 64, 1024, 256
    x2 = jax.random.normal(ka, (B2, Din2), dtype=jnp.float32)
    w2 = jax.random.normal(kwb, (Dout2, Din2), dtype=jnp.float32) * 0.02
    b2 = jax.random.normal(kbb, (Dout2,), dtype=jnp.float32) * 0.02
    out2 = jax.block_until_ready(ff_layer(x2, w2, b2, tk=256))
    assert jnp.allclose(out2, ff_layer_ref(x2, w2, b2), atol=1e-4, rtol=1e-4)

    print("KERNEL_OK")
</pallas_src>

<mosaic_0001>
module attributes {stable_mosaic.version = 11 : i64} {
  func.func @ff_kernel_fused(%arg0: i32, %arg1: i32, %arg2: memref<8x128xf32, #tpu.memory_space<vmem>>, %arg3: memref<128x128xf32, #tpu.memory_space<vmem>>, %arg4: memref<1x128xf32, #tpu.memory_space<vmem>>, %arg5: memref<8x128xf32, #tpu.memory_space<vmem>>) attributes {dimension_semantics = [#tpu.dimension_semantics<parallel>, #tpu.dimension_semantics<parallel>], iteration_bounds = array<i64: 1, 1>, scalar_prefetch = 0 : i64, scratch_operands = 0 : i64, tpu.core_type = #tpu.core_type<tc>, window_params = [{transform_indices = @transform_0, window_bounds = array<i64: 8, 128>}, {transform_indices = @transform_1, window_bounds = array<i64: 128, 128>}, {transform_indices = @transform_2, window_bounds = array<i64: 1, 128>}, {transform_indices = @transform_3, window_bounds = array<i64: 8, 128>}]} {
    %c0 = arith.constant 0 : index
    %c0_0 = arith.constant 0 : index
    %0 = vector.load %arg2[%c0, %c0_0] : memref<8x128xf32, #tpu.memory_space<vmem>>, vector<8x128xf32>
    %c0_1 = arith.constant 0 : index
    %c0_2 = arith.constant 0 : index
    %1 = vector.load %arg3[%c0_1, %c0_2] : memref<128x128xf32, #tpu.memory_space<vmem>>, vector<128x128xf32>
    %cst = arith.constant dense<0.000000e+00> : vector<8x128xf32>
    %2 = tpu.matmul %0, %1, %cst {dimension_numbers = #tpu.dot_dimension_numbers<[1], [1], [0], [0], [0, 0, 1, 0], [], []>} : vector<8x128xf32>, vector<128x128xf32>, vector<8x128xf32> -> vector<8x128xf32>
    %c0_3 = arith.constant 0 : index
    %c0_4 = arith.constant 0 : index
    %3 = vector.load %arg4[%c0_3, %c0_4] : memref<1x128xf32, #tpu.memory_space<vmem>>, vector<1x128xf32>
    %4 = vector.broadcast %3 : vector<1x128xf32> to vector<8x128xf32>
    %5 = arith.addf %2, %4 : vector<8x128xf32>
    %cst_5 = arith.constant 0.000000e+00 : f32
    %6 = vector.broadcast %cst_5 : f32 to vector<8x128xf32>
    %7 = arith.maximumf %5, %6 : vector<8x128xf32>
    %c0_6 = arith.constant 0 : index
    %c0_7 = arith.constant 0 : index
    %8 = vector.load %arg5[%c0_6, %c0_7] : memref<8x128xf32, #tpu.memory_space<vmem>>, vector<8x128xf32>
    tpu.vector_store %arg5[%c0_6, %c0_7], %7 {strides = array<i32>} : memref<8x128xf32, #tpu.memory_space<vmem>>, vector<8x128xf32>,
    return
  }
  func.func @transform_0(%arg0: i32, %arg1: i32) -> (i32, i32) {
    %c0_i32 = arith.constant 0 : i32
    %c0_i32_0 = arith.constant 0 : i32
    return %arg0, %c0_i32 : i32, i32
  }
  func.func @transform_1(%arg0: i32, %arg1: i32) -> (i32, i32) {
    %c0_i32 = arith.constant 0 : i32
    %c0_i32_0 = arith.constant 0 : i32
    return %arg1, %c0_i32 : i32, i32
  }
  func.func @transform_2(%arg0: i32, %arg1: i32) -> (i32, i32) {
    %c0_i32 = arith.constant 0 : i32
    %c0_i32_0 = arith.constant 0 : i32
    return %c0_i32, %arg1 : i32, i32
  }
  func.func @transform_3(%arg0: i32, %arg1: i32) -> (i32, i32) {
    %c0_i32 = arith.constant 0 : i32
    return %arg0, %arg1 : i32, i32
  }
}

</mosaic_0001>

<llo_original>
// kernel: ff_layer.1
$region0: #{ff_layer.1}
  #allocation0 [shape = 'u32[]', space=smem, size = 0x4, offset = 0x4, fixed_abs, tag = 'smem constant byte address 0x4 - core index']
  #allocation1 [shape = 'u32[144,128]{1,0:T(1,128)}', space=vmem, size = 0x12000, scoped, tag = 'internal scratch']
  %s0 = inlined_call_operand.vmem [shape: f32[8,128], index: 0, kind: input, shape index: {}]
  %s1 = inlined_call_operand.vmem [shape: f32[128,128], index: 1, kind: input, shape index: {}]
  %s2 = inlined_call_operand.vmem [shape: f32[1,128], index: 2, kind: input, shape index: {}]
  %s3 = inlined_call_operand.hbm [shape: f32[8,128], index: 3, kind: output, shape index: {}]
  %s4 = sld [smem:[#allocation0]]
  $region22: #{ff_layer.1} parent=0
    _
  %s6 = ssub.s32 1, %s4
  %s7 = scalar_select 0, %s6, %s4
  $region1: #{ff_layer.1} parent=0
    #allocation2 [shape = 'u8[4096]{0}', space=vmem, size = 0x1000, scoped, tag = 'output window, operand 0, single buffered']
    #allocation3 [shape = 's32[1]{0}', space=sflag, size = 0x4, scoped, tag = 'scoped memory for ff_layer.1']
    %8 = vsyncpa [#allocation3], 0
    // Predicated region
    $region2: #{ff_layer.1} parent=1 // pred_check
      _
    $region3: #{ff_layer.1} parent=1 // pred_check_branch
      %10 = sbr.rel (0) target = $region5
    $region4: #{ff_layer.1} parent=1 // pred_region
      _
    $region5: #{ff_layer.1} parent=1 // pred_fallthru
      _
    // Predicated region
    $region6: #{ff_layer.1} parent=1 // pred_check
      _
    $region7: #{ff_layer.1} parent=1 // pred_check_branch
      %12 = sbr.rel (0) target = $region9
    $region8: #{ff_layer.1} parent=1 // pred_region
      _
    $region9: #{ff_layer.1} parent=1 // pred_fallthru
      _
    // Predicated region
    $region10: #{ff_layer.1} parent=1 // pred_check
      _
    $region11: #{ff_layer.1} parent=1 // pred_check_branch
      %14 = sbr.rel (0) target = $region13
    $region12: #{ff_layer.1} parent=1 // pred_region
      _
    $region13: #{ff_layer.1} parent=1 // pred_fallthru
      _
    %v15 = vld [vmem:[%s0] sm:$0xff]
    %v16 = vld [vmem:[%s1] sm:$0xff]
    %v17 = vld [vmem:[%s1 + $0x8] sm:$0xff]
    %v18 = vld [vmem:[%s1 + $0x10] sm:$0xff]
    %v19 = vld [vmem:[%s1 + $0x18] sm:$0xff]
    %v20 = vld [vmem:[%s1 + $0x20] sm:$0xff]
    %v21 = vld [vmem:[%s1 + $0x28] sm:$0xff]
    %v22 = vld [vmem:[%s1 + $0x30] sm:$0xff]
    %v23 = vld [vmem:[%s1 + $0x38] sm:$0xff]
    %v24 = vld [vmem:[%s1 + $0x40] sm:$0xff]
    %v25 = vld [vmem:[%s1 + $0x48] sm:$0xff]
    %v26 = vld [vmem:[%s1 + $0x50] sm:$0xff]
    %v27 = vld [vmem:[%s1 + $0x58] sm:$0xff]
    %v28 = vld [vmem:[%s1 + $0x60] sm:$0xff]
    %v29 = vld [vmem:[%s1 + $0x68] sm:$0xff]
    %v30 = vld [vmem:[%s1 + $0x70] sm:$0xff]
    %v31 = vld [vmem:[%s1 + $0x78] sm:$0xff]
    %v32 = vld [vmem:[%s2] sm:$0x1]
    %v34 = vlaneseq
    %v35 = vshrl.u32 %v34, 7
    %v36 = vsub.s32 0, %v35
    %v37 = vrot.slane %v32, %v36
    %39 = vmatprep.subr.mxu0 0.0
    %40 = vmatpush1.xpose.msra.mxu0 %v16
    %41 = vmatprep.subr.mxu0 0.0
    %42 = vmatpush1.xpose.msra.mxu0 %v17
    %43 = vmatprep.subr.mxu0 0.0
    %44 = vmatpush1.xpose.msra.mxu0 %v18
    %45 = vmatprep.subr.mxu0 0.0
    %46 = vmatpush1.xpose.msra.mxu0 %v19
    %47 = vmatprep.subr.mxu0 0.0
    %48 = vmatpush1.xpose.msra.mxu0 %v20
    %49 = vmatprep.subr.mxu0 0.0
    %50 = vmatpush1.xpose.msra.mxu0 %v21
    %51 = vmatprep.subr.mxu0 0.0
    %52 = vmatpush1.xpose.msra.mxu0 %v22
    %53 = vmatprep.subr.mxu0 0.0
    %54 = vmatpush1.xpose.msra.mxu0 %v23
    %55 = vmatprep.subr.mxu0 0.0
    %56 = vmatpush1.xpose.msra.mxu0 %v24
    %57 = vmatprep.subr.mxu0 0.0
    %58 = vmatpush1.xpose.msra.mxu0 %v25
    %59 = vmatprep.subr.mxu0 0.0
    %60 = vmatpush1.xpose.msra.mxu0 %v26
    %61 = vmatprep.subr.mxu0 0.0
    %62 = vmatpush1.xpose.msra.mxu0 %v27
    %63 = vmatprep.subr.mxu0 0.0
    %64 = vmatpush1.xpose.msra.mxu0 %v28
    %65 = vmatprep.subr.mxu0 0.0
    %66 = vmatpush1.xpose.msra.mxu0 %v29
    %67 = vmatprep.subr.mxu0 0.0
    %68 = vmatpush1.xpose.msra.mxu0 %v30
    %69 = vmatprep.subr.mxu0 0.0
    %70 = vmatpush1.xpose.msra.mxu0 %v31
    %71 = vmatprep.subr.mxu0 0.0
    %72 = vmatpush1.xpose.msra.mxu0 0.0
    %73 = vmatprep.subr.mxu0 0.0
    %74 = vmatpush1.xpose.msra.mxu0 0.0
    %75 = vmatprep.subr.mxu0 0.0
    %76 = vmatpush1.xpose.msra.mxu0 0.0
    %77 = vmatprep.subr.mxu0 0.0
    %78 = vmatpush1.xpose.msra.mxu0 0.0
    %79 = vmatprep.subr.mxu0 0.0
    %80 = vmatpush1.xpose.msra.mxu0 0.0
    %81 = vmatprep.subr.mxu0 0.0
    %82 = vmatpush1.xpose.msra.mxu0 0.0
    %83 = vmatprep.subr.mxu0 0.0
    %84 = vmatpush1.xpose.msra.mxu0 0.0
    %85 = vmatprep.subr.mxu0 0.0
    %86 = vmatpush1.xpose.msra.mxu0 0.0
    %87 = vmatprep.subr.mxu0 0.0
    %88 = vmatpush1.xpose.msra.mxu0 0.0
    %89 = vmatprep.subr.mxu0 0.0
    %90 = vmatpush1.xpose.msra.mxu0 0.0
    %91 = vmatprep.subr.mxu0 0.0
    %92 = vmatpush1.xpose.msra.mxu0 0.0
    %93 = vmatprep.subr.mxu0 0.0
    %94 = vmatpush1.xpose.msra.mxu0 0.0
    %95 = vmatprep.subr.mxu0 0.0
    %96 = vmatpush1.xpose.msra.mxu0 0.0
    %97 = vmatprep.subr.mxu0 0.0
    %98 = vmatpush1.xpose.msra.mxu0 0.0
    %99 = vmatprep.subr.mxu0 0.0
    %100 = vmatpush1.xpose.msra.mxu0 0.0
    %101 = vmatprep.subr.mxu0 0.0
    %102 = vmatpush1.xpose.msra.mxu0 0.0
    %103 = vmatprep.mubr.f32.mxu0 0.0
    %104 = vmatmul.mubr.f32.gmra.mrb[0].mxu0 %v15
    %v105 = vpop.f32.mrb[0].mxu0
    %v106 = vadd.f32 %v37, %v105
    %v107 = vpop.f32.mrb[0].mxu0
    %108 = vdwg.mxu0
    %v109 = vmax.f32 %v106, 0.0
    %110 = vst [vmem:[#allocation2] sm:$0xff] %v109
    // Predicated region
    $region14: #{ff_layer.1} parent=1 // pred_check
      _
    $region15: #{ff_layer.1} parent=1 // pred_check_branch
      %112 = sbr.rel (0) target = $region17
    $region16: #{ff_layer.1} parent=1 // pred_region
      %s114 = ssub.s32 128, 128
      %115 = vsyncadd [#allocation3], %s114
      %s117 = sshll.u32 [#allocation2], 4
      %s118 = int_to_ptr.vmem [resolvable:$true] %s117
      %120 = dma.vmem_to_hbm [thread:$0]  %s118, 128, %s3, [#allocation3]
    $region17: #{ff_layer.1} parent=1 // pred_fallthru
      _
    // Predicated region
    $region18: #{ff_layer.1} parent=1 // pred_check
      _
    $region19: #{ff_layer.1} parent=1 // pred_check_branch
      %122 = sbr.rel (0) target = $region21
    $region20: #{ff_layer.1} parent=1 // pred_region
      %123 = dma.done [#allocation3], 128
    $region21: #{ff_layer.1} parent=1 // pred_fallthru
      _
    %124 = vsyncpa [#allocation3], 1

</llo_original>
